<compile_context>
chip_gen: v5e
topology: v5e:2x2
jax: 0.10.0
libtpu: 0.0.40
codegen_flags: <defaults>
</compile_context>

<pallas_src>
import numpy as np

import jax
import jax.numpy as jnp
from jax.experimental import pallas as pl
from jax.experimental.pallas import tpu as pltpu

TAU = 0.1                      # contrastive temperature
EPS = 1e-8
_INV_SQRT_TAU = (1.0 / TAU) ** 0.5


# ---------------------------------------------------------------------------
# Kernel 1: per-view L2 normalization (+ 1/sqrt(tau) fold) -> bf16
# ---------------------------------------------------------------------------
def _normalize_kernel(x_ref, o_ref):
    """x_ref: [1, TB, D] f32 row-tile of one view; o_ref: [1, TB, D] bf16."""
    x = x_ref[0]                                                  # [TB, D] f32
    inv = jax.lax.rsqrt(jnp.sum(x * x, axis=-1, keepdims=True) + EPS)
    o_ref[0] = (x * (inv * _INV_SQRT_TAU)).astype(jnp.bfloat16)


def _normalize_views(feats):
    """feats: [V, B, D] f32 -> [V, B, D] bf16 (unit rows scaled by 1/sqrt(tau))."""
    V, B, D = feats.shape
    tb = B if B <= 512 else 512          # row-tile keeps the block in scoped VMEM
    return pl.pallas_call(
        _normalize_kernel,
        out_shape=jax.ShapeDtypeStruct((V, B, D), jnp.bfloat16),
        grid=(V, pl.cdiv(B, tb)),
        in_specs=[pl.BlockSpec((1, tb, D), lambda v, r: (v, r, 0))],
        out_specs=pl.BlockSpec((1, tb, D), lambda v, r: (v, r, 0)),
        compiler_params=pltpu.CompilerParams(
            dimension_semantics=("parallel", "parallel")),
    )(feats)


# ---------------------------------------------------------------------------
# Kernel 2: fused symmetric supervised InfoNCE over all view pairs
# ---------------------------------------------------------------------------
def _pairs_kernel(ia_ref, ib_ref,            # scalar-prefetch pair index tables
                  feats_ref,                 # [V, B, D] bf16, VMEM-resident
                  tcol_ref, trow_ref,        # [B, 1], [1, B] int32 labels
                  loss_ref,                  # [1, 1] f32 accumulator/output
                  invp_r, invp_c):           # [B,1] / [1,B] f32 scratch
    p = pl.program_id(0)
    n_pairs = pl.num_programs(0)
    B = feats_ref.shape[1]

    @pl.when(p == 0)
    def _init():
        loss_ref[...] = jnp.zeros_like(loss_ref)
        # Exact positive-count reciprocals, computed once (labels are constant
        # across pairs) — removes two [B,B] XLU reductions from every pair.
        eq = (tcol_ref[...] == trow_ref[...]).astype(jnp.float32)        # [B,B]
        invp_r[...] = 1.0 / jnp.maximum(jnp.sum(eq, axis=1, keepdims=True), 1.0)
        invp_c[...] = 1.0 / jnp.maximum(jnp.sum(eq, axis=0, keepdims=True), 1.0)

    # Pick the two views for this pair (dynamic leading-axis slice of the
    # resident [V,B,D] tensor — no per-pair HBM re-fetch).
    a = feats_ref[ia_ref[p]]                 # [B, D] bf16 (1/sqrt(tau) folded)
    b = feats_ref[ib_ref[p]]                 # [B, D] bf16

    # Cosine-similarity logits / tau on the MXU (bf16 in, f32 accumulate).
    logits = jax.lax.dot_general(
        a, b, (((1,), (1,)), ((), ())),
        preferred_element_type=jnp.float32)                              # [B,B]

    # Single exp pass: |logits| <= 1/tau = 10, so exp is f32-safe without a
    # max-subtraction; both softmax directions reuse E.
    E = jnp.exp(logits)

    # Masked logits via a cheap VPU compare+select (mask never materialized as
    # a separate f32 [B,B] array and never shipped from HBM).
    pos = tcol_ref[...] == trow_ref[...]
    P = jnp.where(pos, logits, 0.0)

    # a -> b : row-wise (lane) reductions on the XLU.
    lse_r = jnp.log(jnp.sum(E, axis=1, keepdims=True))                   # [B,1]
    s1 = jnp.sum(jnp.sum(P, axis=1, keepdims=True) * invp_r[...])
    s2 = jnp.sum(lse_r)

    # b -> a : column reductions moved onto the MXU (ones-row matmul) to keep
    # the two XLU slots free; mask is symmetric so no transpose is needed.
    ones_row = jnp.ones((1, B), jnp.float32)
    col_E = jax.lax.dot_general(ones_row, E, (((1,), (0,)), ((), ())),
                                preferred_element_type=jnp.float32)      # [1,B]
    col_P = jax.lax.dot_general(ones_row, P, (((1,), (0,)), ((), ())),
                                preferred_element_type=jnp.float32)      # [1,B]
    lse_c = jnp.log(col_E)
    s3 = jnp.sum(col_P * invp_c[...])
    s4 = jnp.sum(lse_c)

    # 0.5 * (loss_ab + loss_ba) with the lse factored out of the masked sums.
    loss_ref[...] += (s2 + s4 - s1 - s3) * (0.5 / B)

    @pl.when(p == n_pairs - 1)
    def _finish():
        loss_ref[...] = loss_ref[...] / n_pairs


def _pairs_call(feats_n, t_col, t_row, pair_a, pair_b):
    V, B, D = feats_n.shape
    n_pairs = int(pair_a.shape[0])

    grid_spec = pltpu.PrefetchScalarGridSpec(
        num_scalar_prefetch=2,
        grid=(n_pairs,),
        in_specs=[
            # all normalized views stay VMEM-resident (constant block index)
            pl.BlockSpec((V, B, D), lambda p, ia, ib: (0, 0, 0)),
            # labels stay VMEM-resident across all pairs
            pl.BlockSpec((B, 1), lambda p, ia, ib: (0, 0)),
            pl.BlockSpec((1, B), lambda p, ia, ib: (0, 0)),
        ],
        # scalar accumulator: resident output block across the pair axis
        out_specs=pl.BlockSpec((1, 1), lambda p, ia, ib: (0, 0)),
        scratch_shapes=[pltpu.VMEM((B, 1), jnp.float32),
                        pltpu.VMEM((1, B), jnp.float32)],
    )

    cost = pl.CostEstimate(
        flops=2 * n_pairs * B * B * (D + 2),
        transcendentals=n_pairs * B * (B + 2),
        bytes_accessed=V * B * D * 2 + 2 * B * 4 + 4,
    )

    # TODO(synk): on v7x, emit per-pair partials (or a row-tiled "parallel"
    # axis) so both TensorCores are used; the single accumulator forces
    # "arbitrary" here.
    compiler_kwargs = {"dimension_semantics": ("arbitrary",)}
    vmem_est = V * B * D * 2 * 2 + 6 * B * B * 4 + 8 * B + (1 << 20)
    if vmem_est > (32 << 20):
        # Large-B path: raise the scoped-VMEM limit with headroom (see TODO at
        # top of file about switching to the flash-style tiled variant).
        compiler_kwargs["vmem_limit_bytes"] = min(int(vmem_est * 1.25), 96 << 20)

    return pl.pallas_call(
        _pairs_kernel,
        out_shape=jax.ShapeDtypeStruct((1, 1), jnp.float32),
        grid_spec=grid_spec,
        compiler_params=pltpu.CompilerParams(**compiler_kwargs),
        cost_estimate=cost,
    )(pair_a, pair_b, feats_n, t_col, t_row)


# ---------------------------------------------------------------------------
# Shared glue: pooling + stacking of the per-view features
# ---------------------------------------------------------------------------
def _pool_and_stack(feat_list):
    feats = []
    for f in feat_list:
        f = jnp.asarray(f)
        if f.ndim == 4:                       # NCHW -> global average pool
            f = jnp.mean(f, axis=(2, 3))
        feats.append(f.astype(jnp.float32))
    return jnp.stack(feats, axis=0)           # [V, B, D]


# ---------------------------------------------------------------------------
# Core loss on the stacked [V,B,D] features, with a pure-JAX backward
# ---------------------------------------------------------------------------
def _core_ref(stacked, target):
    """Pure-JAX f32 reference over stacked [V,B,D] features (used for bwd)."""
    f = stacked * jax.lax.rsqrt(
        jnp.sum(stacked * stacked, axis=-1, keepdims=True) + EPS)
    target = jnp.asarray(target)
    mask = (target[:, None] == target[None, :]).astype(jnp.float32)
    pos = jnp.maximum(jnp.sum(mask, axis=-1, keepdims=True), 1.0)

    def nce(lg):
        lse = jax.nn.logsumexp(lg, axis=-1, keepdims=True)
        return -jnp.mean(jnp.sum(mask * (lg - lse), axis=-1, keepdims=True) / pos)

    V = f.shape[0]
    total, n = 0.0, 0
    for i in range(V):
        for j in range(i + 1, V):
            lg = f[i] @ f[j].T / TAU
            total = total + 0.5 * (nce(lg) + nce(lg.T))
            n += 1
    return total / max(n, 1)


def _core_fwd_pallas(stacked, target):
    V, B, D = stacked.shape
    target = jnp.asarray(target).astype(jnp.int32)
    t_col = target.reshape(B, 1)
    t_row = target.reshape(1, B)

    feats_n = _normalize_views(stacked)        # [V,B,D] bf16, 1/sqrt(tau) folded

    pairs = [(i, j) for i in range(V) for j in range(i + 1, V)]
    pair_a = jnp.asarray([p[0] for p in pairs], dtype=jnp.int32)
    pair_b = jnp.asarray([p[1] for p in pairs], dtype=jnp.int32)

    loss = _pairs_call(feats_n, t_col, t_row, pair_a, pair_b)
    return loss[0, 0]


@jax.custom_vjp
def _mmic_core(stacked, target):
    return _core_fwd_pallas(stacked, target)


def _mmic_core_fwd(stacked, target):
    return _core_fwd_pallas(stacked, target), (stacked, target)


def _mmic_core_bwd(res, g):
    stacked, target = res
    # Exact backward via pure-JAX recompute (forward stays on the Pallas path).
    grad_stacked = jax.grad(_core_ref)(stacked, target)
    ct_target = np.zeros(np.shape(target), dtype=jax.dtypes.float0)
    return (g * grad_stacked, ct_target)


_mmic_core.defvjp(_mmic_core_fwd, _mmic_core_bwd)


# ---------------------------------------------------------------------------
# Forward pass (module semantics)
# ---------------------------------------------------------------------------
def mmic_loss(feat_list, target):
    """Mean symmetric supervised InfoNCE over all view pairs.

    feat_list : list of per-view features, each either [B, D] embeddings or
                NCHW conv feature maps [B, C, H, W] (global-average-pooled to
                [B, C] in glue).
    target    : [B] integer labels defining the supervised positives.
    """
    if len(feat_list) < 2:
        return jnp.zeros((), jnp.float32)
    stacked = _pool_and_stack(feat_list)
    target = jnp.asarray(target).astype(jnp.int32)
    return _mmic_core(stacked, target)


# ---------------------------------------------------------------------------
# Pure-JAX reference (f32) for a loose sanity check
# ---------------------------------------------------------------------------
def _mmic_loss_ref(feat_list, target):
    if len(feat_list) < 2:
        return jnp.zeros((), jnp.float32)
    return _core_ref(_pool_and_stack(feat_list), jnp.asarray(target))


if __name__ == "__main__":
    key = jax.random.PRNGKey(0)
    k1, k2, k3 = jax.random.split(key, 3)

    B, C, H, W = 8, 32, 8, 8
    feat_conv = jax.random.normal(k1, (B, C, H, W), dtype=jnp.float32)  # NCHW view
    feat_emb = jax.random.normal(k2, (B, C), dtype=jnp.float32)         # embedding view
    target = jax.random.randint(k3, (B,), 0, 4, dtype=jnp.int32)

    loss = mmic_loss([feat_conv, feat_emb], target)
    loss = jax.block_until_ready(loss)

    ref = _mmic_loss_ref([feat_conv, feat_emb], target)
    assert jnp.isfinite(loss)
    assert jnp.abs(loss - ref) < 0.2, (loss, ref)   # bf16 tolerance
    print("KERNEL_OK")
</pallas_src>

<mosaic_0001>
module attributes {stable_mosaic.version = 11 : i64} {
  func.func @_normalize_kernel(%arg0: i32, %arg1: i32, %arg2: memref<1x8x32xf32, #tpu.memory_space<vmem>>, %arg3: memref<1x8x32xbf16, #tpu.memory_space<vmem>>) attributes {dimension_semantics = [#tpu.dimension_semantics<parallel>, #tpu.dimension_semantics<parallel>], iteration_bounds = array<i64: 2, 1>, scalar_prefetch = 0 : i64, scratch_operands = 0 : i64, tpu.core_type = #tpu.core_type<tc>, window_params = [{transform_indices = @transform_0, window_bounds = array<i64: 1, 8, 32>}, {transform_indices = @transform_1, window_bounds = array<i64: 1, 8, 32>}]} {
    %c0 = arith.constant 0 : index
    %c0_0 = arith.constant 0 : index
    %c0_1 = arith.constant 0 : index
    %0 = vector.load %arg2[%c0, %c0_0, %c0_1] : memref<1x8x32xf32, #tpu.memory_space<vmem>>, vector<1x8x32xf32>
    %1 = vector.shape_cast %0 : vector<1x8x32xf32> to vector<8x32xf32>
    %2 = arith.mulf %1, %1 : vector<8x32xf32>
    %cst = arith.constant dense<0.000000e+00> : vector<8xf32>
    %3 = vector.multi_reduction <add>, %2, %cst [1] : vector<8x32xf32> to vector<8xf32>
    %4 = vector.shape_cast %3 : vector<8xf32> to vector<8x1xf32>
    %cst_2 = arith.constant 9.99999993E-9 : f32
    %5 = vector.broadcast %cst_2 : f32 to vector<8x1xf32>
    %6 = arith.addf %4, %5 : vector<8x1xf32>
    %7 = math.rsqrt %6 : vector<8x1xf32>
    %cst_3 = arith.constant 3.1622777 : f32
    %8 = vector.broadcast %cst_3 : f32 to vector<8x1xf32>
    %9 = arith.mulf %7, %8 : vector<8x1xf32>
    %10 = vector.broadcast %9 : vector<8x1xf32> to vector<8x32xf32>
    %11 = arith.mulf %1, %10 : vector<8x32xf32>
    %12 = arith.truncf %11 : vector<8x32xf32> to vector<8x32xbf16>
    %c0_4 = arith.constant 0 : index
    %c0_5 = arith.constant 0 : index
    %c0_6 = arith.constant 0 : index
    %13 = vector.load %arg3[%c0_4, %c0_5, %c0_6] : memref<1x8x32xbf16, #tpu.memory_space<vmem>>, vector<1x8x32xbf16>
    %14 = vector.shape_cast %13 : vector<1x8x32xbf16> to vector<8x32xbf16>
    %15 = vector.shape_cast %12 : vector<8x32xbf16> to vector<1x8x32xbf16>
    tpu.vector_store %arg3[%c0_4, %c0_5, %c0_6], %15 {strides = array<i32>} : memref<1x8x32xbf16, #tpu.memory_space<vmem>>, vector<1x8x32xbf16>,
    return
  }
  func.func @transform_0(%arg0: i32, %arg1: i32) -> (i32, i32, i32) {
    %c0_i32 = arith.constant 0 : i32
    %c0_i32_0 = arith.constant 0 : i32
    return %arg0, %arg1, %c0_i32 : i32, i32, i32
  }
  func.func @transform_1(%arg0: i32, %arg1: i32) -> (i32, i32, i32) {
    %c0_i32 = arith.constant 0 : i32
    %c0_i32_0 = arith.constant 0 : i32
    return %arg0, %arg1, %c0_i32 : i32, i32, i32
  }
}

</mosaic_0001>

<llo_original>
// kernel: tpu_custom_call.1
$region0: #{tpu_custom_call.1}
  #allocation0 [shape = 'u32[]', space=smem, size = 0x4, offset = 0x4, fixed_abs, tag = 'smem constant byte address 0x4 - core index']
  #allocation1 [shape = 'u32[72,128]{1,0:T(1,128)}', space=vmem, size = 0x9000, scoped, tag = 'internal scratch']
  %s0 = inlined_call_operand.hbm [shape: f32[2,8,32], index: 0, kind: input, shape index: {}]
  %s1 = inlined_call_operand.hbm [shape: bf16[2,8,32], index: 1, kind: output, shape index: {}]
  %s2 = sld [smem:[#allocation0]]
  $region41: #{tpu_custom_call.1} parent=0
    _
  %s4 = ssub.s32 1, %s2
  %s5 = scalar_select 0, %s4, %s2
  $region1: #{tpu_custom_call.1} parent=0
    #allocation2 [shape = 'u8[8192]{0}', space=vmem, size = 0x2000, scoped, tag = 'input window, operand 0']
    #allocation3 [shape = 's32[2]{0}', space=sflag, size = 0x8, scoped, tag = 'scoped memory for tpu_custom_call.1']
    #allocation4 [shape = 's32[2]{0}', space=sflag, size = 0x8, scoped, tag = 'scoped memory for tpu_custom_call.1']
    #allocation5 [shape = 'u8[4096]{0}', space=vmem, size = 0x1000, scoped, tag = 'output window, operand 0']
    %6 = vsyncpa [#allocation3], 0
    %s7 = scalar_lea.sflag [#allocation3], 1
    %8 = vsyncpa %s7, 0
    %9 = vsyncpa [#allocation4], 0
    %s10 = scalar_lea.sflag [#allocation4], 1
    %11 = vsyncpa %s10, 0
    loop: start=0, step=1, limit=4
    $region2: #{tpu_custom_call.1} parent=1 // loop_pre_header
      _
    $region3: #{tpu_custom_call.1} parent=1 // loop_header
      %s13 = sphi 0, %s17
      %p14 = scmp.ge.s32.totalorder %s13, 4
      %s20 = sphi 0, %s32
      %s21 = sphi 0, %s28
      %s22 = sphi 0, %s20
      %s23 = sphi 0, %s21
      %s24 = sphi 0, %s22
      %s25 = sphi 0, %s23
      %s37 = sphi 0, %s39
      %s40 = sphi 0, %s37
      %s41 = sphi 0, %s40
      %s57 = sphi 0, %s41
      %s65 = sphi 0, %s67
      %s68 = sphi 0, %s65
      %s69 = sphi 0, %s68
      %s85 = sphi 0, %s69
    $region4: #{tpu_custom_call.1} parent=1 // loop_header_branch
      %16 = sbr.rel (%p14) target = $region8
    $region5: #{tpu_custom_call.1} parent=1 // loop_body
      %s18 = ssub.s32 %s13, 1
      %s19 = ssub.s32 %s13, 2
      %s26 = sadd.s32 1, %s21
      %p27 = scmp.ge.s32.totalorder %s26, 1
      %s28 = scalar_select %p27, 0, %s26
      %s29 = sadd.s32 1, %s20
      %s30 = scalar_select %p27, %s29, %s20
      %p31 = scmp.ge.s32.totalorder %s30, 2
      %s32 = scalar_select %p31, 0, %s30
      %s33 = ssub.s32 %s20, %s32
      %s34 = ssub.s32 %s21, %s28
      %s35 = sor.u32 %s33, %s34
      %p36 = scmp.eq.s32.totalorder %s35, 0
      %s38 = sadd.s32 %s37, 1
      %s39 = scalar_select %p36, %s37, %s38
      %p42 = pneg %p36
      %p43 = scmp.eq.s32.totalorder %s13, 1
      %p44 = por %p42, %p43
      %p45 = scmp.ne.s32.totalorder %s37, %s40
      %p46 = scmp.eq.s32.totalorder %s13, 0
      %p47 = por %p45, %p46
      %p48 = scmp.ne.s32.totalorder %s37, %s40
      %p49 = scmp.eq.s32.totalorder %s18, 1
      %p50 = por %p48, %p49
      %p51 = scmp.ne.s32.totalorder %s40, %s41
      %p52 = scmp.eq.s32.totalorder %s18, 0
      %p53 = por %p51, %p52
      %p54 = scmp.ne.s32.totalorder %s40, %s41
      %p55 = scmp.eq.s32.totalorder %s19, 1
      %p56 = por %p54, %p55
      %p58 = scmp.ne.s32.totalorder %s41, %s57
      %p59 = scmp.eq.s32.totalorder %s19, 0
      %p60 = por %p58, %p59
      %s61 = ssub.s32 %s20, %s32
      %s62 = ssub.s32 %s21, %s28
      %s63 = sor.u32 %s61, %s62
      %p64 = scmp.eq.s32.totalorder %s63, 0
      %s66 = sadd.s32 %s65, 1
      %s67 = scalar_select %p64, %s65, %s66
      %p70 = pneg %p64
      %p71 = scmp.eq.s32.totalorder %s13, 1
      %p72 = por %p70, %p71
      %p73 = scmp.ne.s32.totalorder %s65, %s68
      %p74 = scmp.eq.s32.totalorder %s13, 0
      %p75 = por %p73, %p74
      %p76 = scmp.ne.s32.totalorder %s65, %s68
      %p77 = scmp.eq.s32.totalorder %s18, 1
      %p78 = por %p76, %p77
      %p79 = scmp.ne.s32.totalorder %s68, %s69
      %p80 = scmp.eq.s32.totalorder %s18, 0
      %p81 = por %p79, %p80
      %p82 = scmp.ne.s32.totalorder %s68, %s69
      %p83 = scmp.eq.s32.totalorder %s19, 1
      %p84 = por %p82, %p83
      %p86 = scmp.ne.s32.totalorder %s69, %s85
      %p87 = scmp.eq.s32.totalorder %s19, 0
      %p88 = por %p86, %p87
      %p89 = scmp.le.s32.totalorder 1, %s13
      %p90 = scmp.lt.s32.totalorder %s13, 3
      %p91 = pnand %p89, %p90
      %p92 = pneg %p91
      // Predicated region
      $region9: #{tpu_custom_call.1} parent=5 // pred_check
        _
      $region10: #{tpu_custom_call.1} parent=5 // pred_check_branch
        %94 = sbr.rel (%p91) target = $region12
      $region11: #{tpu_custom_call.1} parent=5 // pred_region
        %s95 = ssub.s32 %s13, 1
      $region12: #{tpu_custom_call.1} parent=5 // pred_fallthru
        _
      %p96 = scmp.lt.s32.totalorder %s13, 2
      // Predicated region
      $region13: #{tpu_custom_call.1} parent=5 // pred_check
        %p97 = pneg %p96
      $region14: #{tpu_custom_call.1} parent=5 // pred_check_branch
        %99 = sbr.rel (%p97) target = $region16
      $region15: #{tpu_custom_call.1} parent=5 // pred_region
        // Predicated region
        $region17: #{tpu_custom_call.1} parent=15 // pred_check
          %p100 = pneg %p47
        $region18: #{tpu_custom_call.1} parent=15 // pred_check_branch
          %102 = sbr.rel (%p100) target = $region20
        $region19: #{tpu_custom_call.1} parent=15 // pred_region
          %s103 = sand.u32 %s37, 1
          %s104 = scalar_lea.sflag [#allocation3], %s103
          %s105 = sand.u32 %s37, 1
          %s106 = smul.addr %s105, 8
          %s107 = scalar_lea.vmem [#allocation2], %s106
          %109 = vsyncadd %s104, 0
          %s110 = sadd.s32 %s21, %s20
          %s111 = smul.addr %s110, 8
          %s112 = scalar_lea.hbm %s0, %s111
          %s114 = sshll.u32 %s112, 4
          %s115 = int_to_ptr.hbm [resolvable:$true] %s114
          %s116 = sshll.u32 %s107, 4
          %s117 = int_to_ptr.vmem [resolvable:$true] %s116
          %119 = dma.hbm_to_vmem [thread:$0]  %s115, 128, %s117, %s104
        $region20: #{tpu_custom_call.1} parent=15 // pred_fallthru
          _
      $region16: #{tpu_custom_call.1} parent=5 // pred_fallthru
        _
      %p120 = scmp.le.s32.totalorder 1, %s13
      %p121 = scmp.lt.s32.totalorder %s13, 3
      %p122 = pnand %p120, %p121
      %p123 = pneg %p122
      // Predicated region
      $region21: #{tpu_custom_call.1} parent=5 // pred_check
        _
      $region22: #{tpu_custom_call.1} parent=5 // pred_check_branch
        %125 = sbr.rel (%p122) target = $region24
      $region23: #{tpu_custom_call.1} parent=5 // pred_region
        %s126 = ssub.s32 %s13, 1
        %s127 = sand.u32 %s40, 1
        %s128 = scalar_lea.sflag [#allocation3], %s127
        %s129 = sand.u32 %s40, 1
        %s130 = smul.addr %s129, 8
        %s131 = scalar_lea.vmem [#allocation2], %s130
        // Predicated region
        $region25: #{tpu_custom_call.1} parent=23 // pred_check
          %p132 = pneg %p53
        $region26: #{tpu_custom_call.1} parent=23 // pred_check_branch
          %134 = sbr.rel (%p132) target = $region28
        $region27: #{tpu_custom_call.1} parent=23 // pred_region
          %136 = dma.done %s128, 128
        $region28: #{tpu_custom_call.1} parent=23 // pred_fallthru
          _
        %s137 = sand.u32 %s40, 1
        %s138 = scalar_lea.sflag [#allocation3], %s137
        %s139 = sand.u32 %s40, 1
        %s140 = smul.addr %s139, 8
        %s141 = scalar_lea.vmem [#allocation2], %s140
        %p142 = pneg %p53
        %p143 = pneg %p50
        %p144 = pneg %p81
        %p145 = pneg %p78
        %s146 = sand.u32 %s68, 1
        %s147 = scalar_lea.sflag [#allocation4], %s146
        %s148 = sand.u32 %s68, 1
        %s149 = smul.addr %s148, 4
        %s150 = scalar_lea.vmem [#allocation5], %s149
        %v151 = vld [vmem:[%s131] sm:$0xff]
        %v152 = vmul.f32 %v151, %v151
        %vm153 = vcmask 261120
        %v154 = vsel %vm153, %v152, 0.0
        %155 = vadd.xlane.f32.xlu0 %v154
        %v156 = vpop.xlane.xlu0 %155
        %v157 = vadd.f32 %v156, 1e-08
        %v158 = vrsqrt.pop %v157
        %v159 = vmul.f32 %v158, %v157
        %v160 = vmul.f32 %v159, %v158
        %v161 = vmul.f32 0.5, %v160
        %v162 = vsub.f32 1.5, %v161
        %v163 = vmul.f32 %v158, %v162
        %vm164 = vweird.f32 %v157
        %vm165 = vweird.f32 %v158
        %vm166 = vmor %vm164, %vm165
        %v167 = vsel %vm166, %v158, %v163
        %v168 = vmul.f32 %v167, 3.1622777
        %v169 = vmul.f32 %v151, %v168
        %v170 = vpack.c.bf16 %v169, %v169
        %vm171 = vcmask 257024
        %172 = vst.msk [vmem:[%s150] sm:$0xf] %vm171, %v170
        %s173 = sand.u32 %s68, 1
        %s174 = scalar_lea.sflag [#allocation4], %s173
        %s175 = sand.u32 %s68, 1
        %s176 = smul.addr %s175, 4
        %s177 = scalar_lea.vmem [#allocation5], %s176
        // Predicated region
        $region29: #{tpu_custom_call.1} parent=23 // pred_check
          %p178 = pneg %p78
        $region30: #{tpu_custom_call.1} parent=23 // pred_check_branch
          %180 = sbr.rel (%p178) target = $region32
        $region31: #{tpu_custom_call.1} parent=23 // pred_region
          %182 = vsyncadd %s174, 0
          %s183 = sadd.s32 %s23, %s22
          %s184 = smul.addr %s183, 4
          %s185 = scalar_lea.hbm %s1, %s184
          %s187 = sshll.u32 %s177, 4
          %s188 = int_to_ptr.vmem [resolvable:$true] %s187
          %s189 = sshll.u32 %s185, 4
          %s190 = int_to_ptr.hbm [resolvable:$true] %s189
          %192 = dma.vmem_to_hbm [thread:$0]  %s188, 64, %s190, %s174
        $region32: #{tpu_custom_call.1} parent=23 // pred_fallthru
          _
      $region24: #{tpu_custom_call.1} parent=5 // pred_fallthru
        _
      %p193 = scmp.le.s32.totalorder 2, %s13
      // Predicated region
      $region33: #{tpu_custom_call.1} parent=5 // pred_check
        %p194 = pneg %p193
      $region34: #{tpu_custom_call.1} parent=5 // pred_check_branch
        %196 = sbr.rel (%p194) target = $region36
      $region35: #{tpu_custom_call.1} parent=5 // pred_region
        %s197 = ssub.s32 %s13, 2
        // Predicated region
        $region37: #{tpu_custom_call.1} parent=35 // pred_check
          %p198 = pneg %p84
        $region38: #{tpu_custom_call.1} parent=35 // pred_check_branch
          %200 = sbr.rel (%p198) target = $region40
        $region39: #{tpu_custom_call.1} parent=35 // pred_region
          %s201 = sand.u32 %s69, 1
          %s202 = scalar_lea.sflag [#allocation4], %s201
          %s203 = sand.u32 %s69, 1
          %s204 = smul.addr %s203, 4
          %s205 = scalar_lea.vmem [#allocation5], %s204
          %207 = dma.done %s202, 64
        $region40: #{tpu_custom_call.1} parent=35 // pred_fallthru
          _
      $region36: #{tpu_custom_call.1} parent=5 // pred_fallthru
        _
    $region6: #{tpu_custom_call.1} parent=1 // loop_footer
      %s17 = sadd.s32 1, %s13
    $region7: #{tpu_custom_call.1} parent=1 // loop_footer_branch
      %12 = sbr.rel target = $region3
    $region8: #{tpu_custom_call.1} parent=1 // loop_exit
      _
    %208 = vsyncpa [#allocation3], 1
    %s209 = scalar_lea.sflag [#allocation3], 1
    %210 = vsyncpa %s209, 1
    %211 = vsyncpa [#allocation4], 1
    %s212 = scalar_lea.sflag [#allocation4], 1
    %213 = vsyncpa %s212, 1

</llo_original>
